<compile_context>
chip_gen: v6e
topology: v6e:2x2x1
jax: 0.10.0
libtpu: 0.0.40
codegen_flags: <defaults>
</compile_context>

<pallas_src>
import functools

import jax
import jax.numpy as jnp
from jax import lax
from jax.experimental import pallas as pl
from jax.experimental.pallas import tpu as pltpu

ALPHA = 0.6


def _attention_kernel(x_ref, y_ref, mem_ref, w1_ref, b1_ref, w2_ref, b2_ref,
                      out_ref, mem_tmp_ref, *, shortcut: bool):
    x = x_ref[...]                                   # [B, C] f32
    y = y_ref[...]                                   # [B, K] f32
    mem = mem_ref[...]                               # [K, H] f32

    # bf16 MXU feeds (cast in-kernel on the idle VPU); f32 accumulation throughout.
    x_bf = x.astype(jnp.bfloat16)
    mem_bf = mem.astype(jnp.bfloat16)
    w1_bf = w1_ref[...].astype(jnp.bfloat16)
    w2_bf = w2_ref[...].astype(jnp.bfloat16)

    # q = fc1(x)
    q = jnp.dot(x_bf, w1_bf, preferred_element_type=jnp.float32) + b1_ref[...]   # [B, H]

    # scores = q @ mem.T : transposed-RHS contraction handled by Mosaic directly,
    # no separate transpose op and no extra mem_t input.
    s = lax.dot_general(q.astype(jnp.bfloat16), mem_bf,
                        (((1,), (1,)), ((), ())),
                        preferred_element_type=jnp.float32)                       # [B, K]

    # softmax over classes (f32 math, exact divide).
    s_max = jnp.max(s, axis=-1, keepdims=True)
    e = jnp.exp(s - s_max)
    p = e / jnp.sum(e, axis=-1, keepdims=True)                                    # [B, K]

    # att = (p[:,:,None] * mem[None,:,:]).sum(1) == p @ mem
    att = jnp.dot(p.astype(jnp.bfloat16), mem_bf,
                  preferred_element_type=jnp.float32)                             # [B, H]

    # out = fc2(att) (+ x if shortcut)
    out = jnp.dot(att.astype(jnp.bfloat16), w2_bf,
                  preferred_element_type=jnp.float32) + b2_ref[...]               # [B, C]
    if shortcut:
        out = out + x
    out_ref[...] = out.astype(out_ref.dtype)

    # mem_tmp[i] = alpha * mem[i] + (1-alpha) * mean_b( 1[argmax(y_b)==i] * att_b )
    B, K = y.shape
    col = lax.broadcasted_iota(jnp.int32, (B, K), 1)
    ymax = jnp.max(y, axis=1, keepdims=True)
    # first index achieving the max (matches torch.argmax tie behaviour)
    cand = jnp.where(y == ymax, col, jnp.full((B, K), K, jnp.int32))
    idx = jnp.min(cand, axis=1, keepdims=True)                                    # [B, 1]
    onehot = (col == idx).astype(jnp.float32)                                     # [B, K]

    # sum over batch of onehot[:, i] * att, divided by B -> [K, H]; f32 feeds
    # (tiny matmul, keep full accuracy for the memory-bank EMA).
    agg = lax.dot_general(onehot, att, (((0,), (0,)), ((), ())),
                          preferred_element_type=jnp.float32) * (1.0 / B)
    mem_tmp_ref[...] = (ALPHA * mem + (1.0 - ALPHA) * agg).astype(mem_tmp_ref.dtype)


@functools.partial(jax.jit, static_argnames=("shortcut",))
def attention_forward(x, y, mem, w1, b1, w2, b2, *, shortcut=True):
    B, C = x.shape
    K, H = mem.shape

    vmem = pl.BlockSpec(memory_space=pltpu.MemorySpace.VMEM)
    kernel = functools.partial(_attention_kernel, shortcut=shortcut)
    return pl.pallas_call(
        kernel,
        out_shape=(
            jax.ShapeDtypeStruct((B, C), x.dtype),
            jax.ShapeDtypeStruct((K, H), mem.dtype),
        ),
        in_specs=[vmem] * 7,
        out_specs=(vmem, vmem),
    )(x, y, mem, w1, b1, w2, b2)


def attention_reference(x, y, mem, w1, b1, w2, b2, *, shortcut=True):
    """Plain-JAX f32 reference mirroring the PyTorch forward."""
    q = x @ w1 + b1
    p = jax.nn.softmax(q @ mem.T, axis=-1)
    att = (p[:, :, None] * mem[None, :, :]).sum(axis=1)
    idx = jnp.argmax(y, axis=1)
    onehot = (idx[:, None] == jnp.arange(mem.shape[0])[None, :]).astype(x.dtype)
    mem_tmp = ALPHA * mem + (1.0 - ALPHA) * jnp.mean(
        onehot[:, :, None] * att[:, None, :], axis=0)
    out = att @ w2 + b2
    if shortcut:
        out = out + x
    return out, mem_tmp


if __name__ == "__main__":
    B, C, H, K = 8, 256, 128, 10  # batch, features, fc1 hidden, classes / mem slots
    key = jax.random.PRNGKey(0)
    kx, ky, km, kw1, kb1, kw2, kb2 = jax.random.split(key, 7)

    x = jax.random.normal(kx, (B, C), jnp.float32)
    y = jax.random.normal(ky, (B, K), jnp.float32)          # class logits
    mem = jax.random.normal(km, (K, H), jnp.float32)

    # fc1: C->H, fc2: H->C, stored pre-transposed.
    w1 = jax.random.normal(kw1, (C, H), jnp.float32) * 0.05
    b1 = jax.random.normal(kb1, (1, H), jnp.float32) * 0.05
    w2 = jax.random.normal(kw2, (H, C), jnp.float32) * 0.05
    b2 = jax.random.normal(kb2, (1, C), jnp.float32) * 0.05

    out, mem_tmp = jax.block_until_ready(
        attention_forward(x, y, mem, w1, b1, w2, b2, shortcut=True))

    out_ref, mem_tmp_ref = attention_reference(
        x, y, mem, w1, b1[0], w2, b2[0], shortcut=True)

    assert out.shape == (B, C) and mem_tmp.shape == (K, H)
    # bf16 MXU feeds (f32 accumulation) => modest tolerances vs the f32 reference.
    assert jnp.allclose(out, out_ref, atol=5e-2, rtol=5e-2)
    assert jnp.allclose(mem_tmp, mem_tmp_ref, atol=2e-2, rtol=2e-2)
    print("KERNEL_OK")
</pallas_src>

<mosaic_0001>
module attributes {stable_mosaic.version = 11 : i64} {
  func.func @_attention_kernel(%arg0: memref<8x256xf32, #tpu.memory_space<vmem>>, %arg1: memref<8x10xf32, #tpu.memory_space<vmem>>, %arg2: memref<10x128xf32, #tpu.memory_space<vmem>>, %arg3: memref<256x128xf32, #tpu.memory_space<vmem>>, %arg4: memref<1x128xf32, #tpu.memory_space<vmem>>, %arg5: memref<128x256xf32, #tpu.memory_space<vmem>>, %arg6: memref<1x256xf32, #tpu.memory_space<vmem>>, %arg7: memref<8x256xf32, #tpu.memory_space<vmem>>, %arg8: memref<10x128xf32, #tpu.memory_space<vmem>>) attributes {dimension_semantics = [], scalar_prefetch = 0 : i64, scratch_operands = 0 : i64, tpu.core_type = #tpu.core_type<tc>} {
    %c0 = arith.constant 0 : index
    %c0_0 = arith.constant 0 : index
    %0 = vector.load %arg0[%c0, %c0_0] : memref<8x256xf32, #tpu.memory_space<vmem>>, vector<8x256xf32>
    %c0_1 = arith.constant 0 : index
    %c0_2 = arith.constant 0 : index
    %1 = vector.load %arg1[%c0_1, %c0_2] : memref<8x10xf32, #tpu.memory_space<vmem>>, vector<8x10xf32>
    %c0_3 = arith.constant 0 : index
    %c0_4 = arith.constant 0 : index
    %2 = vector.load %arg2[%c0_3, %c0_4] : memref<10x128xf32, #tpu.memory_space<vmem>>, vector<10x128xf32>
    %3 = arith.truncf %0 : vector<8x256xf32> to vector<8x256xbf16>
    %4 = arith.truncf %2 : vector<10x128xf32> to vector<10x128xbf16>
    %c0_5 = arith.constant 0 : index
    %c0_6 = arith.constant 0 : index
    %5 = vector.load %arg3[%c0_5, %c0_6] : memref<256x128xf32, #tpu.memory_space<vmem>>, vector<256x128xf32>
    %6 = arith.truncf %5 : vector<256x128xf32> to vector<256x128xbf16>
    %c0_7 = arith.constant 0 : index
    %c0_8 = arith.constant 0 : index
    %7 = vector.load %arg5[%c0_7, %c0_8] : memref<128x256xf32, #tpu.memory_space<vmem>>, vector<128x256xf32>
    %8 = arith.truncf %7 : vector<128x256xf32> to vector<128x256xbf16>
    %cst = arith.constant dense<0.000000e+00> : vector<8x128xf32>
    %9 = tpu.matmul %3, %6, %cst {dimension_numbers = #tpu.dot_dimension_numbers<[1], [0], [0], [1], [0, 0, 1, 1], [], []>} : vector<8x256xbf16>, vector<256x128xbf16>, vector<8x128xf32> -> vector<8x128xf32>
    %c0_9 = arith.constant 0 : index
    %c0_10 = arith.constant 0 : index
    %10 = vector.load %arg4[%c0_9, %c0_10] : memref<1x128xf32, #tpu.memory_space<vmem>>, vector<1x128xf32>
    %11 = vector.broadcast %10 : vector<1x128xf32> to vector<8x128xf32>
    %12 = arith.addf %9, %11 : vector<8x128xf32>
    %13 = arith.truncf %12 : vector<8x128xf32> to vector<8x128xbf16>
    %cst_11 = arith.constant dense<0.000000e+00> : vector<8x10xf32>
    %14 = tpu.matmul %13, %4, %cst_11 {dimension_numbers = #tpu.dot_dimension_numbers<[1], [1], [0], [0], [0, 0, 1, 0], [], []>} : vector<8x128xbf16>, vector<10x128xbf16>, vector<8x10xf32> -> vector<8x10xf32>
    %cst_12 = arith.constant dense<0xFF800000> : vector<8xf32>
    %15 = vector.multi_reduction <maximumf>, %14, %cst_12 [1] : vector<8x10xf32> to vector<8xf32>
    %16 = vector.shape_cast %15 : vector<8xf32> to vector<8x1xf32>
    %17 = vector.broadcast %16 : vector<8x1xf32> to vector<8x10xf32>
    %18 = arith.subf %14, %17 : vector<8x10xf32>
    %19 = math.exp %18 : vector<8x10xf32>
    %cst_13 = arith.constant dense<0.000000e+00> : vector<8xf32>
    %20 = vector.multi_reduction <add>, %19, %cst_13 [1] : vector<8x10xf32> to vector<8xf32>
    %21 = vector.shape_cast %20 : vector<8xf32> to vector<8x1xf32>
    %22 = vector.broadcast %21 : vector<8x1xf32> to vector<8x10xf32>
    %23 = arith.divf %19, %22 : vector<8x10xf32>
    %24 = arith.truncf %23 : vector<8x10xf32> to vector<8x10xbf16>
    %cst_14 = arith.constant dense<0.000000e+00> : vector<8x128xf32>
    %25 = tpu.matmul %24, %4, %cst_14 {dimension_numbers = #tpu.dot_dimension_numbers<[1], [0], [0], [1], [0, 0, 1, 1], [], []>} : vector<8x10xbf16>, vector<10x128xbf16>, vector<8x128xf32> -> vector<8x128xf32>
    %26 = arith.truncf %25 : vector<8x128xf32> to vector<8x128xbf16>
    %cst_15 = arith.constant dense<0.000000e+00> : vector<8x256xf32>
    %27 = tpu.matmul %26, %8, %cst_15 {dimension_numbers = #tpu.dot_dimension_numbers<[1], [0], [0], [1], [0, 0, 1, 1], [], []>} : vector<8x128xbf16>, vector<128x256xbf16>, vector<8x256xf32> -> vector<8x256xf32>
    %c0_16 = arith.constant 0 : index
    %c0_17 = arith.constant 0 : index
    %28 = vector.load %arg6[%c0_16, %c0_17] : memref<1x256xf32, #tpu.memory_space<vmem>>, vector<1x256xf32>
    %29 = vector.broadcast %28 : vector<1x256xf32> to vector<8x256xf32>
    %30 = arith.addf %27, %29 : vector<8x256xf32>
    %31 = arith.addf %30, %0 : vector<8x256xf32>
    %c0_18 = arith.constant 0 : index
    %c0_19 = arith.constant 0 : index
    %32 = vector.load %arg7[%c0_18, %c0_19] : memref<8x256xf32, #tpu.memory_space<vmem>>, vector<8x256xf32>
    tpu.vector_store %arg7[%c0_18, %c0_19], %31 {strides = array<i32>} : memref<8x256xf32, #tpu.memory_space<vmem>>, vector<8x256xf32>,
    %33 = tpu.iota {dimensions = array<i32: 1>} : vector<8x10xi32>
    %cst_20 = arith.constant dense<0xFF800000> : vector<8xf32>
    %34 = vector.multi_reduction <maximumf>, %1, %cst_20 [1] : vector<8x10xf32> to vector<8xf32>
    %35 = vector.shape_cast %34 : vector<8xf32> to vector<8x1xf32>
    %36 = vector.broadcast %35 : vector<8x1xf32> to vector<8x10xf32>
    %37 = arith.cmpf oeq, %1, %36 : vector<8x10xf32>
    %c10_i32 = arith.constant 10 : i32
    %38 = vector.broadcast %c10_i32 : i32 to vector<8x10xi32>
    %39 = arith.select %37, %33, %38 : vector<8x10xi1>, vector<8x10xi32>
    %cst_21 = arith.constant dense<2147483647> : vector<8xi32>
    %40 = vector.multi_reduction <minsi>, %39, %cst_21 [1] : vector<8x10xi32> to vector<8xi32>
    %41 = vector.shape_cast %40 : vector<8xi32> to vector<8x1xi32>
    %42 = vector.broadcast %41 : vector<8x1xi32> to vector<8x10xi32>
    %43 = arith.cmpi eq, %33, %42 : vector<8x10xi32>
    %44 = arith.extui %43 : vector<8x10xi1> to vector<8x10xi32>
    %45 = arith.sitofp %44 : vector<8x10xi32> to vector<8x10xf32>
    %cst_22 = arith.constant dense<0.000000e+00> : vector<10x128xf32>
    %46 = tpu.matmul %45, %25, %cst_22 {dimension_numbers = #tpu.dot_dimension_numbers<[0], [0], [1], [1], [0, 1, 1, 1], [], []>} : vector<8x10xf32>, vector<8x128xf32>, vector<10x128xf32> -> vector<10x128xf32>
    %cst_23 = arith.constant 1.250000e-01 : f32
    %47 = vector.broadcast %cst_23 : f32 to vector<10x128xf32>
    %48 = arith.mulf %46, %47 : vector<10x128xf32>
    %cst_24 = arith.constant 6.000000e-01 : f32
    %49 = vector.broadcast %cst_24 : f32 to vector<10x128xf32>
    %50 = arith.mulf %49, %2 : vector<10x128xf32>
    %cst_25 = arith.constant 4.000000e-01 : f32
    %51 = vector.broadcast %cst_25 : f32 to vector<10x128xf32>
    %52 = arith.mulf %51, %48 : vector<10x128xf32>
    %53 = arith.addf %50, %52 : vector<10x128xf32>
    %c0_26 = arith.constant 0 : index
    %c0_27 = arith.constant 0 : index
    %54 = vector.load %arg8[%c0_26, %c0_27] : memref<10x128xf32, #tpu.memory_space<vmem>>, vector<10x128xf32>
    tpu.vector_store %arg8[%c0_26, %c0_27], %53 {strides = array<i32>} : memref<10x128xf32, #tpu.memory_space<vmem>>, vector<10x128xf32>,
    return
  }
}

</mosaic_0001>

<llo_original>
// kernel: attention_forward.1
$region0: #{attention_forward.1}
  #allocation0 [shape = 'u32[]', space=smem, size = 0x4, offset = 0x4, fixed_abs, tag = 'smem constant byte address 0x4 - core index']
  #allocation1 [shape = 'u32[144,128]{1,0:T(1,128)}', space=vmem, size = 0x12000, scoped, tag = 'internal scratch']
  %s0 = inlined_call_operand.hbm [shape: f32[8,256], index: 0, kind: input, shape index: {}]
  %s1 = inlined_call_operand.hbm [shape: f32[8,10], index: 1, kind: input, shape index: {}]
  %s2 = inlined_call_operand.hbm [shape: f32[10,128], index: 2, kind: input, shape index: {}]
  %s3 = inlined_call_operand.hbm [shape: f32[256,128], index: 3, kind: input, shape index: {}]
  %s4 = inlined_call_operand.vmem [shape: f32[1,128], index: 4, kind: input, shape index: {}]
  %s5 = inlined_call_operand.hbm [shape: f32[128,256], index: 5, kind: input, shape index: {}]
  %s6 = inlined_call_operand.vmem [shape: f32[1,256], index: 6, kind: input, shape index: {}]
  %s7 = inlined_call_operand.hbm [shape: f32[8,256], index: 7, kind: output, shape index: {0}]
  %s8 = inlined_call_operand.hbm [shape: f32[10,128], index: 8, kind: output, shape index: {1}]
  %9 = xla_tuple %s7, %s8
  %s10 = sld [smem:[#allocation0]]
  $region66: #{attention_forward.1} parent=0
    _
  %s12 = ssub.s32 1, %s10
  %s13 = scalar_select 0, %s12, %s10
  $region1: #{attention_forward.1} parent=0
    #allocation2 [shape = 'u8[8192]{0}', space=vmem, size = 0x2000, scoped, tag = 'input window, operand 0, single buffered']
    #allocation3 [shape = 's32[1]{0}', space=sflag, size = 0x4, scoped, tag = 'scoped memory for attention_forward.1']
    #allocation4 [shape = 's32[1]{0}', space=sflag, size = 0x4, scoped, tag = 'scoped memory for attention_forward.1']
    #allocation5 [shape = 'u8[4096]{0}', space=vmem, size = 0x1000, scoped, tag = 'input window, operand 1, single buffered']
    #allocation6 [shape = 's32[1]{0}', space=sflag, size = 0x4, scoped, tag = 'scoped memory for attention_forward.1']
    #allocation7 [shape = 'u8[8192]{0}', space=vmem, size = 0x2000, scoped, tag = 'input window, operand 2, single buffered']
    #allocation8 [shape = 'u8[131072]{0}', space=vmem, size = 0x20000, scoped, tag = 'input window, operand 3, single buffered']
    #allocation9 [shape = 's32[1]{0}', space=sflag, size = 0x4, scoped, tag = 'scoped memory for attention_forward.1']
    #allocation10 [shape = 'u8[131072]{0}', space=vmem, size = 0x20000, scoped, tag = 'input window, operand 5, single buffered']
    #allocation11 [shape = 'u8[8192]{0}', space=vmem, size = 0x2000, scoped, tag = 'output window, operand 0, single buffered']
    #allocation12 [shape = 'u8[8192]{0}', space=vmem, size = 0x2000, scoped, tag = 'output window, operand 1, single buffered']
    #allocation13 [shape = 's32[1]{0}', space=sflag, size = 0x4, scoped, tag = 'scoped memory for attention_forward.1']
    %14 = vsyncpa [#allocation3], 0
    %15 = vsyncpa [#allocation6], 0
    %16 = vsyncpa [#allocation9], 0
    %17 = vsyncpa [#allocation4], 0
    %18 = vsyncpa [#allocation13], 0
    // Predicated region
    $region2: #{attention_forward.1} parent=1 // pred_check
      _
    $region3: #{attention_forward.1} parent=1 // pred_check_branch
      %20 = sbr.rel (0) target = $region5
    $region4: #{attention_forward.1} parent=1 // pred_region
      %s22 = ssub.s32 256, 256
      %23 = vsyncadd [#allocation3], %s22
      %s25 = sshll.u32 [#allocation2], 4
      %s26 = int_to_ptr.vmem [resolvable:$true] %s25
      %28 = dma.hbm_to_vmem [thread:$0]  %s0, 256, %s26, [#allocation3]
    $region5: #{attention_forward.1} parent=1 // pred_fallthru
      _
    // Predicated region
    $region6: #{attention_forward.1} parent=1 // pred_check
      _
    $region7: #{attention_forward.1} parent=1 // pred_check_branch
      %30 = sbr.rel (0) target = $region9
    $region8: #{attention_forward.1} parent=1 // pred_region
      %s32 = ssub.s32 128, 128
      %33 = vsyncadd [#allocation6], %s32
      %s35 = sshll.u32 [#allocation5], 4
      %s36 = int_to_ptr.vmem [resolvable:$true] %s35
      %38 = dma.hbm_to_vmem [thread:$0]  %s1, 128, %s36, [#allocation6]
    $region9: #{attention_forward.1} parent=1 // pred_fallthru
      _
    // Predicated region
    $region10: #{attention_forward.1} parent=1 // pred_check
      _
    $region11: #{attention_forward.1} parent=1 // pred_check_branch
      %40 = sbr.rel (0) target = $region13
    $region12: #{attention_forward.1} parent=1 // pred_region
      %s42 = ssub.s32 256, 256
      %43 = vsyncadd [#allocation6], %s42
      %s44 = sshll.u32 [#allocation7], 4
      %s45 = int_to_ptr.vmem [resolvable:$true] %s44
      %50 = dma.hbm_to_vmem [thread:$0]  %s2, 256, %s45, [#allocation6], 128, 128, 8
    $region13: #{attention_forward.1} parent=1 // pred_fallthru
      _
    // Predicated region
    $region14: #{attention_forward.1} parent=1 // pred_check
      _
    $region15: #{attention_forward.1} parent=1 // pred_check_branch
      %52 = sbr.rel (0) target = $region17
    $region16: #{attention_forward.1} parent=1 // pred_region
      %s54 = ssub.s32 4096, 4096
      %55 = vsyncadd [#allocation9], %s54
      %s56 = sshll.u32 [#allocation8], 4
      %s57 = int_to_ptr.vmem [resolvable:$true] %s56
      %62 = dma.hbm_to_vmem [thread:$0]  %s3, 4096, %s57, [#allocation9], 128, 128, 8
    $region17: #{attention_forward.1} parent=1 // pred_fallthru
      _
    // Predicated region
    $region18: #{attention_forward.1} parent=1 // pred_check
      _
    $region19: #{attention_forward.1} parent=1 // pred_check_branch
      %64 = sbr.rel (0) target = $region21
    $region20: #{attention_forward.1} parent=1 // pred_region
      _
    $region21: #{attention_forward.1} parent=1 // pred_fallthru
      _
    // Predicated region
    $region22: #{attention_forward.1} parent=1 // pred_check
      _
    $region23: #{attention_forward.1} parent=1 // pred_check_branch
      %66 = sbr.rel (0) target = $region25
    $region24: #{attention_forward.1} parent=1 // pred_region
      %s68 = ssub.s32 4096, 4096
      %69 = vsyncadd [#allocation9], %s68
      %s70 = sshll.u32 [#allocation10], 4
      %s71 = int_to_ptr.vmem [resolvable:$true] %s70
      %76 = dma.hbm_to_vmem [thread:$0]  %s5, 4096, %s71, [#allocation9], 256, 256, 16
    $region25: #{attention_forward.1} parent=1 // pred_fallthru
      _
    // Predicated region
    $region26: #{attention_forward.1} parent=1 // pred_check
      _
    $region27: #{attention_forward.1} parent=1 // pred_check_branch
      %78 = sbr.rel (0) target = $region29
    $region28: #{attention_forward.1} parent=1 // pred_region
      _
    $region29: #{attention_forward.1} parent=1 // pred_fallthru
      _
    // Predicated region
    $region30: #{attention_forward.1} parent=1 // pred_check
      _
    $region31: #{attention_forward.1} parent=1 // pred_check_branch
      %80 = sbr.rel (0) target = $region33
    $region32: #{attention_forward.1} parent=1 // pred_region
      %81 = dma.done [#allocation3], 256
    $region33: #{attention_forward.1} parent=1 // pred_fallthru
      _
    // Predicated region
    $region34: #{attention_forward.1} parent=1 // pred_check
      _
    $region35: #{attention_forward.1} parent=1 // pred_check_branch
      %83 = sbr.rel (0) target = $region37
    $region36: #{attention_forward.1} parent=1 // pred_region
      %84 = dma.done [#allocation6], 128
    $region37: #{attention_forward.1} parent=1 // pred_fallthru
      _
    // Predicated region
    $region38: #{attention_forward.1} parent=1 // pred_check
      _
    $region39: #{attention_forward.1} parent=1 // pred_check_branch
      %86 = sbr.rel (0) target = $region41
    $region40: #{attention_forward.1} parent=1 // pred_region
      %87 = dma.done [#allocation6], 256
    $region41: #{attention_forward.1} parent=1 // pred_fallthru
      _
    // Predicated region
    $region42: #{attention_forward.1} parent=1 // pred_check
      _
    $region43: #{attention_forward.1} parent=1 // pred_check_branch
      %89 = sbr.rel (0) target = $region45
    $region44: #{attention_forward.1} parent=1 // pred_region
      %90 = dma.done [#allocation9], 4096
    $region45: #{attention_forward.1} parent=1 // pred_fallthru
      _
    // Predicated region
    $region46: #{attention_forward.1} parent=1 // pred_check
      _
    $region47: #{attention_forward.1} parent=1 // pred_check_branch
      %92 = sbr.rel (0) target = $region49
    $region48: #{attention_forward.1} parent=1 // pred_region
      %93 = dma.done [#allocation9], 4096
    $region49: #{attention_forward.1} parent=1 // pred_fallthru
      _
    %v95 = vld [vmem:[#allocation2] sm:$0xff]
    %v96 = vld [vmem:[#allocation2 + $0x8] sm:$0xff]
    %v97 = vld [vmem:[#allocation5] sm:$0xff]
    %v98 = vld [vmem:[#allocation7] sm:$0xff]
    %v99 = vld [vmem:[#allocation7 + $0x8] sm:$0x3]
    %v100 = vpack.c.bf16 %v95, %v95
    %v101 = vpack.c.bf16 %v96, %v96
    %v102 = vpack.c.bf16 %v99, %v98
    %v103 = vld [vmem:[#allocation8] sm:$0xff]
    %v104 = vld [vmem:[#allocation8 + $0x8] sm:$0xff]
    %v105 = vld [vmem:[#allocation8 + $0x10] sm:$0xff]
    %v106 = vld [vmem:[#allocation8 + $0x18] sm:$0xff]
    %v107 = vld [vmem:[#allocation8 + $0x20] sm:$0xff]
    %v108 = vld [vmem:[#allocation8 + $0x28] sm:$0xff]
    %v109 = vld [vmem:[#allocation8 + $0x30] sm:$0xff]
    %v110 = vld [vmem:[#allocation8 + $0x38] sm:$0xff]
    %v111 = vld [vmem:[#allocation8 + $0x40] sm:$0xff]
    %v112 = vld [vmem:[#allocation8 + $0x48] sm:$0xff]
    %v113 = vld [vmem:[#allocation8 + $0x50] sm:$0xff]
    %v114 = vld [vmem:[#allocation8 + $0x58] sm:$0xff]
    %v115 = vld [vmem:[#allocation8 + $0x60] sm:$0xff]
    %v116 = vld [vmem:[#allocation8 + $0x68] sm:$0xff]
    %v117 = vld [vmem:[#allocation8 + $0x70] sm:$0xff]
    %v118 = vld [vmem:[#allocation8 + $0x78] sm:$0xff]
    %v119 = vld [vmem:[#allocation8 + $0x80] sm:$0xff]
    %v120 = vld [vmem:[#allocation8 + $0x88] sm:$0xff]
    %v121 = vld [vmem:[#allocation8 + $0x90] sm:$0xff]
    %v122 = vld [vmem:[#allocation8 + $0x98] sm:$0xff]
    %v123 = vld [vmem:[#allocation8 + $0xa0] sm:$0xff]
    %v124 = vld [vmem:[#allocation8 + $0xa8] sm:$0xff]
    %v125 = vld [vmem:[#allocation8 + $0xb0] sm:$0xff]
    %v126 = vld [vmem:[#allocation8 + $0xb8] sm:$0xff]
    %v127 = vld [vmem:[#allocation8 + $0xc0] sm:$0xff]
    %v128 = vld [vmem:[#allocation8 + $0xc8] sm:$0xff]
    %v129 = vld [vmem:[#allocation8 + $0xd0] sm:$0xff]
    %v130 = vld [vmem:[#allocation8 + $0xd8] sm:$0xff]
    %v131 = vld [vmem:[#allocation8 + $0xe0] sm:$0xff]
    %v132 = vld [vmem:[#allocation8 + $0xe8] sm:$0xff]
    %v133 = vld [vmem:[#allocation8 + $0xf0] sm:$0xff]
    %v134 = vld [vmem:[#allocation8 + $0xf8] sm:$0xff]
    %v135 = vpack.c.bf16 %v104, %v103
    %v136 = vpack.c.bf16 %v106, %v105
    %v137 = vpack.c.bf16 %v108, %v107
    %v138 = vpack.c.bf16 %v110, %v109
    %v139 = vpack.c.bf16 %v112, %v111
    %v140 = vpack.c.bf16 %v114, %v113
    %v141 = vpack.c.bf16 %v116, %v115
    %v142 = vpack.c.bf16 %v118, %v117
    %v143 = vpack.c.bf16 %v120, %v119
    %v144 = vpack.c.bf16 %v122, %v121
    %v145 = vpack.c.bf16 %v124, %v123
    %v146 = vpack.c.bf16 %v126, %v125
    %v147 = vpack.c.bf16 %v128, %v127
    %v148 = vpack.c.bf16 %v130, %v129
    %v149 = vpack.c.bf16 %v132, %v131
    %v150 = vpack.c.bf16 %v134, %v133
    %v151 = vld [vmem:[#allocation10] sm:$0xff]
    %v152 = vld [vmem:[#allocation10 + $0x8] sm:$0xff]
    %v153 = vld [vmem:[#allocation10 + $0x10] sm:$0xff]
    %v154 = vld [vmem:[#allocation10 + $0x18] sm:$0xff]
    %v155 = vld [vmem:[#allocation10 + $0x20] sm:$0xff]
    %v156 = vld [vmem:[#allocation10 + $0x28] sm:$0xff]
    %v157 = vld [vmem:[#allocation10 + $0x30] sm:$0xff]
    %v158 = vld [vmem:[#allocation10 + $0x38] sm:$0xff]
    %v159 = vld [vmem:[#allocation10 + $0x40] sm:$0xff]
    %v160 = vld [vmem:[#allocation10 + $0x48] sm:$0xff]
    %v161 = vld [vmem:[#allocation10 + $0x50] sm:$0xff]
    %v162 = vld [vmem:[#allocation10 + $0x58] sm:$0xff]
    %v163 = vld [vmem:[#allocation10 + $0x60] sm:$0xff]
    %v164 = vld [vmem:[#allocation10 + $0x68] sm:$0xff]
    %v165 = vld [vmem:[#allocation10 + $0x70] sm:$0xff]
    %v166 = vld [vmem:[#allocation10 + $0x78] sm:$0xff]
    %v167 = vld [vmem:[#allocation10 + $0x80] sm:$0xff]
    %v168 = vld [vmem:[#allocation10 + $0x88] sm:$0xff]
    %v169 = vld [vmem:[#allocation10 + $0x90] sm:$0xff]
    %v170 = vld [vmem:[#allocation10 + $0x98] sm:$0xff]
    %v171 = vld [vmem:[#allocation10 + $0xa0] sm:$0xff]
    %v172 = vld [vmem:[#allocation10 + $0xa8] sm:$0xff]
    %v173 = vld [vmem:[#allocation10 + $0xb0] sm:$0xff]
    %v174 = vld [vmem:[#allocation10 + $0xb8] sm:$0xff]
    %v175 = vld [vmem:[#allocation10 + $0xc0] sm:$0xff]
    %v176 = vld [vmem:[#allocation10 + $0xc8] sm:$0xff]
    %v177 = vld [vmem:[#allocation10 + $0xd0] sm:$0xff]
    %v178 = vld [vmem:[#allocation10 + $0xd8] sm:$0xff]
    %v179 = vld [vmem:[#allocation10 + $0xe0] sm:$0xff]
    %v180 = vld [vmem:[#allocation10 + $0xe8] sm:$0xff]
    %v181 = vld [vmem:[#allocation10 + $0xf0] sm:$0xff]
    %v182 = vld [vmem:[#allocation10 + $0xf8] sm:$0xff]
    %v183 = vpack.c.bf16 %v153, %v151
    %v184 = vpack.c.bf16 %v154, %v152
    %v185 = vpack.c.bf16 %v157, %v155
    %v186 = vpack.c.bf16 %v158, %v156
    %v187 = vpack.c.bf16 %v161, %v159
    %v188 = vpack.c.bf16 %v162, %v160
    %v189 = vpack.c.bf16 %v165, %v163
    %v190 = vpack.c.bf16 %v166, %v164
    %v191 = vpack.c.bf16 %v169, %v167
    %v192 = vpack.c.bf16 %v170, %v168
    %v193 = vpack.c.bf16 %v173, %v171
    %v194 = vpack.c.bf16 %v174, %v172
    %v195 = vpack.c.bf16 %v177, %v175
    %v196 = vpack.c.bf16 %v178, %v176
    %v197 = vpack.c.bf16 %v181, %v179
    %v198 = vpack.c.bf16 %v182, %v180
    %v199 = vld [vmem:[%s4] sm:$0x1]
    %v201 = vlaneseq
    %v202 = vshrl.u32 %v201, 7
    %v203 = vsub.s32 0, %v202
    %v204 = vrot.slane %v199, %v203
    %206 = vmatprep.subr.bf16.mxu0 0
    %207 = vmatpush1.bf16.msra.mxu0 %v142
    %208 = vmatprep.subr.bf16.mxu0 0
    %209 = vmatpush1.bf16.msra.mxu0 %v141
    %210 = vmatprep.subr.bf16.mxu0 0
    %211 = vmatpush1.bf16.msra.mxu0 %v140
    %212 = vmatprep.subr.bf16.mxu0 0
    %213 = vmatpush1.bf16.msra.mxu0 %v139
    %214 = vmatprep.subr.bf16.mxu0 0
    %215 = vmatpush1.bf16.msra.mxu0 %v138
    %216 = vmatprep.subr.bf16.mxu0 0
    %217 = vmatpush1.bf16.msra.mxu0 %v137
    %218 = vmatprep.subr.bf16.mxu0 0
    %219 = vmatpush1.bf16.msra.mxu0 %v136
    %220 = vmatprep.subr.bf16.mxu0 0
    %221 = vmatpush1.bf16.msra.mxu0 %v135
    %222 = vmatprep.subr.bf16.mxu0 0
    %223 = vmatpush2.bf16.msra.mxu0 %v150
    %224 = vmatprep.subr.bf16.mxu0 0
    %225 = vmatpush2.bf16.msra.mxu0 %v149
    %226 = vmatprep.subr.bf16.mxu0 0
    %227 = vmatpush2.bf16.msra.mxu0 %v148
    %228 = vmatprep.subr.bf16.mxu0 0
    %229 = vmatpush2.bf16.msra.mxu0 %v147
    %230 = vmatprep.subr.bf16.mxu0 0
    %231 = vmatpush2.bf16.msra.mxu0 %v146
    %232 = vmatprep.subr.bf16.mxu0 0
    %233 = vmatpush2.bf16.msra.mxu0 %v145
    %234 = vmatprep.subr.bf16.mxu0 0
    %235 = vmatpush2.bf16.msra.mxu0 %v144
    %236 = vmatprep.subr.bf16.mxu0 0
    %237 = vmatpush2.bf16.msra.mxu0 %v143
    %238 = vmatprep.mubr.bf16.mxu0 %v101
    %239 = vmatmul.mubr.bf16.gmra.mxu0 %v100
    %v240 = vpop.f32.mrf.mxu0
    %v241 = vadd.f32 %v204, %v240
    %v242 = vpop.f32.mrf.mxu0
    %v243 = vpop.f32.mrf.mxu0
    %v244 = vpop.f32.mrf.mxu0
    %245 = vdwg.mxu0
    %v246 = vpack.c.bf16 %v241, %v241
    %247 = vmatprep.subr.bf16.mxu0 0
    %248 = vmatpush1.bf16.xpose.msra.mxu0 0
    %249 = vmatprep.subr.bf16.mxu0 0
    %250 = vmatpush1.bf16.xpose.msra.mxu0 0
    %251 = vmatprep.subr.bf16.mxu0 0
    %252 = vmatpush1.bf16.xpose.msra.mxu0 0
    %253 = vmatprep.subr.bf16.mxu0 0
    %254 = vmatpush1.bf16.xpose.msra.mxu0 0
    %255 = vmatprep.subr.bf16.mxu0 0
    %256 = vmatpush1.bf16.xpose.msra.mxu0 0
    %257 = vmatprep.subr.bf16.mxu0 0
    %258 = vmatpush1.bf16.xpose.msra.mxu0 0
    %259 = vmatprep.subr.bf16.mxu0 0
    %260 = vmatpush1.bf16.xpose.msra.mxu0 0
    %261 = vmatprep.subr.bf16.mxu0 0
    %262 = vmatpush1.bf16.xpose.msra.mxu0 %v102
    %263 = vmatprep.subr.bf16.mxu0 0
    %264 = vmatpush2.bf16.xpose.msra.mxu0 0
    %265 = vmatprep.subr.bf16.mxu0 0
    %266 = vmatpush2.bf16.xpose.msra.mxu0 0
    %267 = vmatprep.subr.bf16.mxu0 0
    %268 = vmatpush2.bf16.xpose.msra.mxu0 0
    %269 = vmatprep.subr.bf16.mxu0 0
    %270 = vmatpush2.bf16.xpose.msra.mxu0 0
    %271 = vmatprep.subr.bf16.mxu0 0
    %272 = vmatpush2.bf16.xpose.msra.mxu0 0
    %273 = vmatprep.subr.bf16.mxu0 0
    %274 = vmatpush2.bf16.xpose.msra.mxu0 0
    %275 = vmatprep.subr.bf16.mxu0 0
    %276 = vmatpush2.bf16.xpose.msra.mxu0 0
    %277 = vmatprep.subr.bf16.mxu0 0
    %278 = vmatpush2.bf16.xpose.msra.mxu0 0
    %279 = vmatprep.mubr.bf16.mxu0 0
    %280 = vmatmul.mubr.bf16.gmra.mxu0 %v246
    %v281 = vpop.f32.mrf.mxu0
    %v282 = vadd.f32 0.0, %v281
    %v283 = vpop.f32.mrf.mxu0
    %v284 = vpop.f32.mrf.mxu0
    %v285 = vpop.f32.mrf.mxu0
    %286 = vdwg.mxu0
    %vm287 = vcmask 80896
    %v288 = vsel %vm287, %v282, -inf
    %289 = vmax.xlane.f32.xlu0 %v288
    %v290 = vpop.xlane.xlu0 %289
    %v291 = vsub.f32 %v282, %v290
    %v292 = vmul.f32 %v291, 1.442695
    %v293 = vpow.pop %v292
    %v294 = vsel %vm287, %v293, 0.0
    %295 = vadd.xlane.f32.xlu0 %v294
    %v296 = vpop.xlane.xlu0 %295
    %v297 = vrcp.pop %v296
    %v298 = vmul.f32 %v293, %v297
    %v299 = vpack.c.bf16 %v298, %v298
    %v301 = vsel %vm287, %v299, 0
    %vm303 = vcmask 1044480
    %v305 = vsel %vm303, %v102, 0
    %307 = vmatprep.subr.bf16.mxu0 0
    %308 = vmatpush1.bf16.msra.mxu0 0
    %309 = vmatprep.subr.bf16.mxu0 0
    %310 = vmatpush1.bf16.msra.mxu0 0
    %311 = vmatprep.subr.bf16.mxu0 0
    %312 = vmatpush1.bf16.msra.mxu0 0
    %313 = vmatprep.subr.bf16.mxu0 0
    %314 = vmatpush1.bf16.msra.mxu0 0
    %315 = vmatprep.subr.bf16.mxu0 0
    %316 = vmatpush1.bf16.msra.mxu0 0
    %317 = vmatprep.subr.bf16.mxu0 0
    %318 = vmatpush1.bf16.msra.mxu0 0
    %319 = vmatprep.subr.bf16.mxu0 0
    %320 = vmatpush1.bf16.msra.mxu0 0
    %321 = vmatprep.subr.bf16.mxu0 0
    %322 = vmatpush1.bf16.msra.mxu0 %v305
    %323 = vmatprep.subr.bf16.mxu0 0
    %324 = vmatpush2.bf16.msra.mxu0 0
    %325 = vmatprep.subr.bf16.mxu0 0
    %326 = vmatpush2.bf16.msra.mxu0 0
    %327 = vmatprep.subr.bf16.mxu0 0
    %328 = vmatpush2.bf16.msra.mxu0 0
    %329 = vmatprep.subr.bf16.mxu0 0
    %330 = vmatpush2.bf16.msra.mxu0 0
    %331 = vmatprep.subr.bf16.mxu0 0
    %332 = vmatpush2.bf16.msra.mxu0 0
    %333 = vmatprep.subr.bf16.mxu0 0
    %334 = vmatpush2.bf16.msra.mxu0 0
    %335 = vmatprep.subr.bf16.mxu0 0
    %336 = vmatpush2.bf16.msra.mxu0 0
    %337 = vmatprep.subr.bf16.mxu0 0
    %338 = vmatpush2.bf16.msra.mxu0 0
    %339 = vmatprep.mubr.bf16.mxu0 0
    %340 = vmatmul.mubr.bf16.gmra.mxu0 %v301
    %v341 = vpop.f32.mrf.mxu0
    %v342 = vadd.f32 0.0, %v341
    %v343 = vpop.f32.mrf.mxu0
    %v344 = vpop.f32.mrf.mxu0
    %v345 = vpop.f32.mrf.mxu0
    %346 = vdwg.mxu0
    %v347 = vpack.c.bf16 %v342, %v342
    %v348 = vld [vmem:[%s6] sm:$0x3]
    %v350 = vlaneseq
    %v351 = vshrl.u32 %v350, 7
    %v352 = vsub.s32 0, %v351
    %v353 = vrot.slane %v348, %v352
    %v354 = vlaneseq
    %v355 = vshrl.u32 %v354, 7
    %v356 = vsub.s32 1, %v355
    %v357 = vrot.slane %v348, %v356
    %360 = vmatprep.subr.bf16.mxu0 %v198
    %361 = vmatpush1.bf16.msra.mxu0 %v197
    %362 = vmatprep.subr.bf16.mxu0 %v196
    %363 = vmatpush1.bf16.msra.mxu0 %v195
    %364 = vmatprep.subr.bf16.mxu0 %v194
    %365 = vmatpush1.bf16.msra.mxu0 %v193
    %366 = vmatprep.subr.bf16.mxu0 %v192
    %367 = vmatpush1.bf16.msra.mxu0 %v191
    %368 = vmatprep.subr.bf16.mxu0 %v190
    %369 = vmatpush1.bf16.msra.mxu0 %v189
    %370 = vmatprep.subr.bf16.mxu0 %v188
    %371 = vmatpush1.bf16.msra.mxu0 %v187
    %372 = vmatprep.subr.bf16.mxu0 %v186
    %373 = vmatpush1.bf16.msra.mxu0 %v185
    %374 = vmatprep.subr.bf16.mxu0 %v184
    %375 = vmatpush1.bf16.msra.mxu0 %v183
    %376 = vmatprep.subr.bf16.mxu0 0
    %377 = vmatpush2.bf16.msra.mxu0 0
    %378 = vmatprep.subr.bf16.mxu0 0
    %379 = vmatpush2.bf16.msra.mxu0 0
    %380 = vmatprep.subr.bf16.mxu0 0
    %381 = vmatpush2.bf16.msra.mxu0 0
    %382 = vmatprep.subr.bf16.mxu0 0
    %383 = vmatpush2.bf16.msra.mxu0 0
    %384 = vmatprep.subr.bf16.mxu0 0
    %385 = vmatpush2.bf16.msra.mxu0 0
    %386 = vmatprep.subr.bf16.mxu0 0
    %387 = vmatpush2.bf16.msra.mxu0 0
    %388 = vmatprep.subr.bf16.mxu0 0
    %389 = vmatpush2.bf16.msra.mxu0 0
    %390 = vmatprep.subr.bf16.mxu0 0
    %391 = vmatpush2.bf16.msra.mxu0 0
    %392 = vmatprep.mubr.bf16.mxu0 0
    %393 = vmatmul.mubr.bf16.gmra.mxu0 %v347
    %v394 = vpop.f32.mrf.mxu0
    %v395 = vadd.f32 %v353, %v394
    %v396 = vpop.f32.mrf.mxu0
    %v397 = vadd.f32 %v357, %v396
    %v398 = vpop.f32.mrf.mxu0
    %v399 = vpop.f32.mrf.mxu0
    %400 = vdwg.mxu0
    %v401 = vadd.f32 %v395, %v95
    %v402 = vadd.f32 %v397, %v96
    %403 = vst [vmem:[#allocation11] sm:$0xff] %v401
    %404 = vst [vmem:[#allocation11 + $0x8] sm:$0xff] %v402
    %v405 = vlaneseq
    %v406 = vand.u32 %v405, 127
    %v407 = vsel %vm287, %v97, -inf
    %408 = vmax.xlane.f32.xlu0 %v407
    %v409 = vpop.xlane.xlu0 %408
    %vm410 = vcmp.eq.f32.partialorder %v97, %v409
    %v411 = vsel %vm410, %v406, 10
    %v412 = vsel %vm287, %v411, 2147483647
    %v413 = vand.u32 %v412, 65535
    %v414 = vshra.s32 %v412, 16
    %v415 = vcvt.s32.f32 %v413
    %v416 = vcvt.s32.f32 %v414
    %417 = vmin.xlane.f32.xlu0 %v416
    %v418 = vpop.xlane.xlu0 %417
    %vm419 = vcmp.eq.f32.partialorder %v416, %v418
    %v420 = vsel %vm419, %v415, inf
    %421 = vmin.xlane.f32.xlu0 %v420
    %v422 = vpop.xlane.xlu0 %421
    %v423 = vcvt.f32.s32 %v422
    %v424 = vcvt.f32.s32 %v418
    %v425 = vshll.u32 %v424, 16
    %v426 = vadd.s32 %v425, %v423
    %vm427 = vcmp.eq.s32.totalorder %v406, %v426
    %v428 = vsel %vm427, 1, 0
    %v429 = vcvt.s32.f32 %v428
    %430 = vxpose.xlu0.b32.start [1/16] %v429, 128
    %431 = vxpose.xlu0.b32.cont [2/16] 0.0, 128
    %432 = vxpose.xlu0.b32.cont [3/16] 0.0, 128
    %433 = vxpose.xlu0.b32.cont [4/16] 0.0, 128
    %434 = vxpose.xlu0.b32.cont [5/16] 0.0, 128
    %435 = vxpose.xlu0.b32.cont [6/16] 0.0, 128
    %436 = vxpose.xlu0.b32.cont [7/16] 0.0, 128
    %437 = vxpose.xlu0.b32.cont [8/16] 0.0, 128
    %438 = vxpose.xlu0.b32.cont [9/16] 0.0, 128
    %439 = vxpose.xlu0.b32.cont [10/16] 0.0, 128
    %440 = vxpose.xlu0.b32.cont [11/16] 0.0, 128
    %441 = vxpose.xlu0.b32.cont [12/16] 0.0, 128
    %442 = vxpose.xlu0.b32.cont [13/16] 0.0, 128
    %443 = vxpose.xlu0.b32.cont [14/16] 0.0, 128
    %444 = vxpose.xlu0.b32.cont [15/16] 0.0, 128
    %445 = vxpose.xlu0.b32.end [16/16] 0.0, 128
    %v446 = vpop.trf.xlu0
    %v447 = vpop.trf.xlu0
    %v448 = vpop.trf.xlu0
    %v449 = vpop.trf.xlu0
    %v450 = vpop.trf.xlu0
    %v451 = vpop.trf.xlu0
    %v452 = vpop.trf.xlu0
    %v453 = vpop.trf.xlu0
    %v454 = vpop.trf.xlu0
    %v455 = vpop.trf.xlu0
    %v456 = vpop.trf.xlu0
    %v457 = vpop.trf.xlu0
    %v458 = vpop.trf.xlu0
    %v459 = vpop.trf.xlu0
    %v460 = vpop.trf.xlu0
    %v461 = vpop.trf.xlu0
    %vm462 = vcmask 64512
    %v464 = vsel %vm462, %v446, 0
    %v467 = vsel %vm462, %v447, 0
    %469 = vmatprep.subr.mxu0 0.0
    %470 = vmatpush1.msra.mxu0 0.0
    %471 = vmatprep.subr.mxu0 0.0
    %472 = vmatpush1.msra.mxu0 0.0
    %473 = vmatprep.subr.mxu0 0.0
    %474 = vmatpush1.msra.mxu0 0.0
    %475 = vmatprep.subr.mxu0 0.0
    %476 = vmatpush1.msra.mxu0 0.0
    %477 = vmatprep.subr.mxu0 0.0
    %478 = vmatpush1.msra.mxu0 0.0
    %479 = vmatprep.subr.mxu0 0.0
    %480 = vmatpush1.msra.mxu0 0.0
    %481 = vmatprep.subr.mxu0 0.0
    %482 = vmatpush1.msra.mxu0 0.0
    %483 = vmatprep.subr.mxu0 0.0
    %484 = vmatpush1.msra.mxu0 0.0
    %485 = vmatprep.subr.mxu0 0.0
    %486 = vmatpush1.msra.mxu0 0.0
    %487 = vmatprep.subr.mxu0 0.0
    %488 = vmatpush1.msra.mxu0 0.0
    %489 = vmatprep.subr.mxu0 0.0
    %490 = vmatpush1.msra.mxu0 0.0
    %491 = vmatprep.subr.mxu0 0.0
    %492 = vmatpush1.msra.mxu0 0.0
    %493 = vmatprep.subr.mxu0 0.0
    %494 = vmatpush1.msra.mxu0 0.0
    %495 = vmatprep.subr.mxu0 0.0
    %496 = vmatpush1.msra.mxu0 0.0
    %497 = vmatprep.subr.mxu0 0.0
    %498 = vmatpush1.msra.mxu0 0.0
    %499 = vmatprep.subr.mxu0 0.0
    %500 = vmatpush1.msra.mxu0 %v342
    %501 = vmatprep.subr.mxu0 0.0
    %502 = vmatpush2.msra.mxu0 0.0
    %503 = vmatprep.subr.mxu0 0.0
    %504 = vmatpush2.msra.mxu0 0.0
    %505 = vmatprep.subr.mxu0 0.0
    %506 = vmatpush2.msra.mxu0 0.0
    %507 = vmatprep.subr.mxu0 0.0
    %508 = vmatpush2.msra.mxu0 0.0
    %509 = vmatprep.subr.mxu0 0.0
    %510 = vmatpush2.msra.mxu0 0.0
    %511 = vmatprep.subr.mxu0 0.0
    %512 = vmatpush2.msra.mxu0 0.0
    %513 = vmatprep.subr.mxu0 0.0
    %514 = vmatpush2.msra.mxu0 0.0
    %515 = vmatprep.subr.mxu0 0.0
    %516 = vmatpush2.msra.mxu0 0.0
    %517 = vmatprep.subr.mxu0 0.0
    %518 = vmatpush2.msra.mxu0 0.0
    %519 = vmatprep.subr.mxu0 0.0
    %520 = vmatpush2.msra.mxu0 0.0
    %521 = vmatprep.subr.mxu0 0.0
    %522 = vmatpush2.msra.mxu0 0.0
    %523 = vmatprep.subr.mxu0 0.0
    %524 = vmatpush2.msra.mxu0 0.0
    %525 = vmatprep.subr.mxu0 0.0
    %526 = vmatpush2.msra.mxu0 0.0
    %527 = vmatprep.subr.mxu0 0.0
    %528 = vmatpush2.msra.mxu0 0.0
    %529 = vmatprep.subr.mxu0 0.0
    %530 = vmatpush2.msra.mxu0 0.0
    %531 = vmatprep.subr.mxu0 0.0
    %532 = vmatpush2.msra.mxu0 0.0
    %533 = vmatprep.mubr.f32.mxu0 0.0
    %534 = vmatmul.mubr.f32.gmra.mxu0 %v464
    %v535 = vpop.f32.mrf.mxu0
    %v536 = vadd.f32 0.0, %v535
    %v537 = vpop.f32.mrf.mxu0
    %538 = vmatprep.mubr.f32.mxu0 0.0
    %539 = vmatmul.mubr.f32.gmra.mxu0 %v467
    %v540 = vpop.f32.mrf.mxu0
    %v541 = vadd.f32 0.0, %v540
    %v542 = vpop.f32.mrf.mxu0
    %543 = vdwg.mxu0
    %v544 = vmul.f32 %v536, 0.125
    %v545 = vmul.f32 %v541, 0.125
    %v546 = vmul.f32 %v98, 0.6
    %v547 = vmul.f32 %v99, 0.6
    %v548 = vmul.f32 %v544, 0.4
    %v549 = vmul.f32 %v545, 0.4
    %v550 = vadd.f32 %v546, %v548
    %v551 = vadd.f32 %v547, %v549
    %552 = vst [vmem:[#allocation12] sm:$0xff] %v550
    %553 = vst [vmem:[#allocation12 + $0x8] sm:$0x3] %v551
    // Predicated region
    $region50: #{attention_forward.1} parent=1 // pred_check
      _
    $region51: #{attention_forward.1} parent=1 // pred_check_branch
      %555 = sbr.rel (0) target = $region53
    $region52: #{attention_forward.1} parent=1 // pred_region
      %s557 = ssub.s32 256, 256
      %558 = vsyncadd [#allocation4], %s557
      %s560 = sshll.u32 [#allocation11], 4
      %s561 = int_to_ptr.vmem [resolvable:$true] %s560
      %563 = dma.vmem_to_hbm [thread:$0]  %s561, 256, %s7, [#allocation4]
    $region53: #{attention_forward.1} parent=1 // pred_fallthru
      _
    // Predicated region
    $region54: #{attention_forward.1} parent=1 // pred_check
      _
    $region55: #{attention_forward.1} parent=1 // pred_check_branch
      %565 = sbr.rel (0) target = $region57
    $region56: #{attention_forward.1} parent=1 // pred_region
      %s567 = ssub.s32 256, 256
      %568 = vsyncadd [#allocation13], %s567
      %s569 = sshll.u32 [#allocation12], 4
      %s570 = int_to_ptr.vmem [resolvable:$true] %s569
      %575 = dma.vmem_to_hbm [thread:$0]  %s570, 256, %s8, [#allocation13], 128, 128, 8
    $region57: #{attention_forward.1} parent=1 // pred_fallthru
      _
    // Predicated region
    $region58: #{attention_forward.1} parent=1 // pred_check
      _
    $region59: #{attention_forward.1} parent=1 // pred_check_branch
      %577 = sbr.rel (0) target = $region61
    $region60: #{attention_forward.1} parent=1 // pred_region
      %578 = dma.done [#allocation4], 256
    $region61: #{attention_forward.1} parent=1 // pred_fallthru
      _
    // Predicated region
    $region62: #{attention_forward.1} parent=1 // pred_check
      _
    $region63: #{attention_forward.1} parent=1 // pred_check_branch
      %580 = sbr.rel (0) target = $region65
    $region64: #{attention_forward.1} parent=1 // pred_region
      %581 = dma.done [#allocation13], 256
    $region65: #{attention_forward.1} parent=1 // pred_fallthru
      _
    %582 = vsyncpa [#allocation3], 1
    %583 = vsyncpa [#allocation6], 1
    %584 = vsyncpa [#allocation9], 1
    %585 = vsyncpa [#allocation4], 1
    %586 = vsyncpa [#allocation13], 1

</llo_original>
